<compile_context>
chip_gen: v5e
topology: v5e:2x2
jax: 0.10.0
libtpu: 0.0.40
codegen_flags: <defaults>
</compile_context>

<pallas_src>
import jax
import jax.numpy as jnp
from jax import lax
from jax.experimental import pallas as pl
from jax.experimental.pallas import tpu as pltpu


_VMEM_LIMIT_BYTES = 48 * 1024 * 1024  # < 64 MiB (v7x physical); raises v5e/v6e default


def _round_up(n, m):
    return ((n + m - 1) // m) * m


# --------------------------------------------------------------------------
# Kernel 1: fused Q/K/V projection.  One wide MXU matmul per (b, row-tile):
#   y = x @ [Wq | Wk | Wv | 0] + [bq | bk | bv | 1]  (Dp x (3*Hp + 128))
# The trailing 128 columns of the V part are exactly 1.0 (zero weights, unit
# bias); the attention kernel uses them to get the softmax denominator from
# the p@v matmul for free.
# --------------------------------------------------------------------------
def _proj_kernel(x_ref, w_ref, b_ref, q_ref, k_ref, v_ref):
    hp = q_ref.shape[-1]
    y = (jnp.dot(x_ref[...], w_ref[...], preferred_element_type=jnp.float32)
         + b_ref[...].astype(jnp.float32))                    # (tp, 3*Hp+128) f32
    y = y.astype(q_ref.dtype)                                 # store in x.dtype
    q_ref[...] = y[:, :hp]                                    # lane-aligned slices
    k_ref[...] = y[:, hp:2 * hp]
    v_ref[...] = y[:, 2 * hp:]                                # (tp, Hp+128)


# --------------------------------------------------------------------------
# Kernel 2: flash-style attention over pre-projected Q/K/V_ext tiles.
# grid = (B, S//tq, S//tk); online-softmax state lives in f32 VMEM scratch.
# --------------------------------------------------------------------------
def _attn_kernel(q_ref, k_ref, v_ref, o_ref, m_sc, l_sc, acc_sc):
    ki = pl.program_id(2)
    hp = o_ref.shape[-1]                  # lane-padded hidden width

    @pl.when(ki == 0)
    def _init():
        m_sc[...] = jnp.full_like(m_sc, -jnp.inf)
        l_sc[...] = jnp.zeros_like(l_sc)
        acc_sc[...] = jnp.zeros_like(acc_sc)

    # scores: contract last dims of q and k (q @ k^T without an explicit k.T).
    # Operands keep the input dtype (bf16 fast path); f32 accumulation.
    s = lax.dot_general(q_ref[...], k_ref[...],
                        dimension_numbers=(((1,), (1,)), ((), ())),
                        preferred_element_type=jnp.float32)   # (tq, tk) f32

    # online softmax update (f32 math on VPU/EUP; v5e-safe).
    m_prev = m_sc[...]
    m_new = jnp.maximum(m_prev, jnp.max(s, axis=-1, keepdims=True))
    alpha = jnp.exp(m_prev - m_new)
    p = jnp.exp(s - m_new)                                    # (tq, tk) f32

    # p @ [V | 1]: columns [:hp] are the weighted values, columns [hp:] all
    # hold sum_k p (denominator) -- the cross-lane sum rides the MXU.
    pv = jnp.dot(p.astype(v_ref.dtype), v_ref[...],
                 preferred_element_type=jnp.float32)          # (tq, hp+128)
    acc_sc[...] = alpha * acc_sc[...] + pv[:, :hp]
    l_sc[...] = alpha * l_sc[...] + pv[:, hp:hp + 1]
    m_sc[...] = m_new

    @pl.when(ki == pl.num_programs(2) - 1)
    def _finalize():
        # exact reciprocal: runs once per q tile on a (tq, 1) vector.
        o_ref[...] = (acc_sc[...] * pl.reciprocal(l_sc[...], approx=False)
                      ).astype(o_ref.dtype)


def _pick_tile(s):
    for t in (256, 128):
        if s % t == 0:
            return t
    return s  # full-extent fallback for small sequences


def self_attention(x, wq, bq, wk, bk, wv, bv, *, tq=None, tk=None):
    """x: (B, S, D_in); wq/wk/wv: (D_in, H); bq/bk/bv: (1, H). Returns (B, S, H)."""
    B, S, D = x.shape
    H = wq.shape[1]
    in_dtype = x.dtype
    itemsize = jnp.dtype(in_dtype).itemsize

    # ---- lane-dense padding (exact): H -> Hp (output lanes), D -> Dp (MXU
    # contraction dim).  Production shapes that are already 128-multiples
    # pass through untouched.
    Hp = _round_up(H, 128)
    Dp = _round_up(D, 128)
    if Hp != H:
        pad_h = ((0, 0), (0, Hp - H))
        wq, wk, wv = jnp.pad(wq, pad_h), jnp.pad(wk, pad_h), jnp.pad(wv, pad_h)
        bq, bk, bv = jnp.pad(bq, pad_h), jnp.pad(bk, pad_h), jnp.pad(bv, pad_h)
    if Dp != D:
        pad_d = ((0, Dp - D), (0, 0))
        wq, wk, wv = jnp.pad(wq, pad_d), jnp.pad(wk, pad_d), jnp.pad(wv, pad_d)
        x = jnp.pad(x, ((0, 0), (0, 0), (0, Dp - D)))

    # ones-column trick: 128 extra V lanes with zero weights and bias 1.0.
    wv_ext = jnp.pad(wv, ((0, 0), (0, 128)))
    bv_ext = jnp.pad(bv, ((0, 0), (0, 128)), constant_values=1.0)

    # fused projection weight / bias: [Wq | Wk | Wv | 0], [bq | bk | bv | 1].
    w_all = jnp.concatenate([wq, wk, wv_ext], axis=1).astype(in_dtype)
    b_all = jnp.concatenate([bq, bk, bv_ext], axis=1).astype(jnp.float32)
    Wtot = 3 * Hp + 128

    # ---- tile sizes: 256 fills the v6e/v7x 256x256 MXU and cuts grid
    # overhead; fall back to 128 / full extent for small or odd S.
    if tq is None:
        tq = _pick_tile(S)
    if tk is None:
        tk = _pick_tile(S)
    assert S % tq == 0 and S % tk == 0, "S must be divisible by tq and tk"

    # v7x has 2 TensorCores: make sure the parallel extent B*(S//tq) >= 2.
    if B * (S // tq) < 2:
        for cand in (tq // 2, tq // 4):
            if cand >= 8 and cand % 8 == 0 and S % cand == 0:
                tq = cand
                break

    n_q_tiles = S // tq
    n_k_tiles = S // tk

    # ------------------------------------------------------------------
    # Pass 1: project Q, K, V_ext once per (B, S) into HBM.
    # ------------------------------------------------------------------
    proj_cost = pl.CostEstimate(
        flops=2 * B * S * Dp * Wtot,
        transcendentals=0,
        bytes_accessed=int(x.size * itemsize + w_all.size * itemsize
                           + b_all.size * 4 + B * S * Wtot * itemsize),
    )
    q_p, k_p, v_p = pl.pallas_call(
        _proj_kernel,
        out_shape=(
            jax.ShapeDtypeStruct((B, S, Hp), in_dtype),
            jax.ShapeDtypeStruct((B, S, Hp), in_dtype),
            jax.ShapeDtypeStruct((B, S, Hp + 128), in_dtype),
        ),
        grid_spec=pltpu.PrefetchScalarGridSpec(
            num_scalar_prefetch=0,
            grid=(B, n_q_tiles),
            in_specs=[
                pl.BlockSpec((None, tq, Dp), lambda b, si: (b, si, 0)),
                # constant-index weight/bias blocks stay resident across steps
                pl.BlockSpec((Dp, Wtot), lambda b, si: (0, 0)),
                pl.BlockSpec((1, Wtot), lambda b, si: (0, 0)),
            ],
            out_specs=[
                pl.BlockSpec((None, tq, Hp), lambda b, si: (b, si, 0)),
                pl.BlockSpec((None, tq, Hp), lambda b, si: (b, si, 0)),
                pl.BlockSpec((None, tq, Hp + 128), lambda b, si: (b, si, 0)),
            ],
        ),
        compiler_params=pltpu.CompilerParams(
            dimension_semantics=("parallel", "parallel"),
            vmem_limit_bytes=_VMEM_LIMIT_BYTES),
        cost_estimate=proj_cost,
    )(x, w_all, b_all)

    # ------------------------------------------------------------------
    # Pass 2: flash attention over the projected tiles.
    # ------------------------------------------------------------------
    attn_cost = pl.CostEstimate(
        flops=2 * B * S * S * Hp + 2 * B * S * S * (Hp + 128),
        transcendentals=B * S * S,
        bytes_accessed=int(B * S * Hp * itemsize                       # q
                           + n_q_tiles * B * S * (2 * Hp + 128) * itemsize  # k, v_ext
                           + B * S * Hp * itemsize),                   # out
    )
    out = pl.pallas_call(
        _attn_kernel,
        out_shape=jax.ShapeDtypeStruct((B, S, Hp), in_dtype),
        grid_spec=pltpu.PrefetchScalarGridSpec(
            num_scalar_prefetch=0,
            grid=(B, n_q_tiles, n_k_tiles),
            in_specs=[
                pl.BlockSpec((None, tq, Hp), lambda b, qi, ki: (b, qi, 0)),
                pl.BlockSpec((None, tk, Hp), lambda b, qi, ki: (b, ki, 0)),
                pl.BlockSpec((None, tk, Hp + 128), lambda b, qi, ki: (b, ki, 0)),
            ],
            out_specs=pl.BlockSpec((None, tq, Hp), lambda b, qi, ki: (b, qi, 0)),
            scratch_shapes=[
                pltpu.VMEM((tq, 1), jnp.float32),    # running max
                pltpu.VMEM((tq, 1), jnp.float32),    # running denominator
                pltpu.VMEM((tq, Hp), jnp.float32),   # output accumulator
            ],
        ),
        compiler_params=pltpu.CompilerParams(
            dimension_semantics=("parallel", "parallel", "arbitrary"),
            vmem_limit_bytes=_VMEM_LIMIT_BYTES),
        cost_estimate=attn_cost,
    )(q_p, k_p, v_p)

    return out[..., :H] if Hp != H else out


def reference(x, wq, bq, wk, bk, wv, bv):
    q = x @ wq + bq
    k = x @ wk + bk
    v = x @ wv + bv
    s = jnp.einsum("bqd,bkd->bqk", q, k)
    p = jax.nn.softmax(s, axis=-1)
    return jnp.einsum("bqk,bkd->bqd", p, v)


if __name__ == "__main__":
    B, S, D_in, H = 2, 8, 32, 32

    key = jax.random.PRNGKey(0)
    kx, kq, kbq, kk, kbk, kv, kbv = jax.random.split(key, 7)

    # Deterministic synthetic parameters (PyTorch Linear stores (H, D_in);
    # here already transposed to (D_in, H)).
    bound = 1.0 / (D_in ** 0.5)
    x = jax.random.normal(kx, (B, S, D_in), dtype=jnp.float32)
    wq = jax.random.uniform(kq, (D_in, H), jnp.float32, -bound, bound)
    bq = jax.random.uniform(kbq, (1, H), jnp.float32, -bound, bound)
    wk = jax.random.uniform(kk, (D_in, H), jnp.float32, -bound, bound)
    bk = jax.random.uniform(kbk, (1, H), jnp.float32, -bound, bound)
    wv = jax.random.uniform(kv, (D_in, H), jnp.float32, -bound, bound)
    bv = jax.random.uniform(kbv, (1, H), jnp.float32, -bound, bound)

    out = self_attention(x, wq, bq, wk, bk, wv, bv)
    out = jax.block_until_ready(out)

    ref = reference(x, wq, bq, wk, bk, wv, bv)
    assert out.shape == (B, S, H)
    assert jnp.allclose(out, ref, atol=1e-5, rtol=1e-5), "mismatch vs JAX reference"

    print("KERNEL_OK")
</pallas_src>

<mosaic_0001>
module attributes {stable_mosaic.version = 11 : i64} {
  func.func @_proj_kernel(%arg0: i32, %arg1: i32, %arg2: memref<1x8x128xf32, #tpu.memory_space<vmem>>, %arg3: memref<128x512xf32, #tpu.memory_space<vmem>>, %arg4: memref<1x512xf32, #tpu.memory_space<vmem>>, %arg5: memref<1x8x128xf32, #tpu.memory_space<vmem>>, %arg6: memref<1x8x128xf32, #tpu.memory_space<vmem>>, %arg7: memref<1x8x256xf32, #tpu.memory_space<vmem>>) attributes {dimension_semantics = [#tpu.dimension_semantics<parallel>, #tpu.dimension_semantics<parallel>], iteration_bounds = array<i64: 2, 1>, scalar_prefetch = 0 : i64, scratch_operands = 0 : i64, tpu.core_type = #tpu.core_type<tc>, window_params = [{transform_indices = @transform_0, window_bounds = array<i64: 1, 8, 128>}, {pipeline_mode = #tpu.pipeline_mode<synchronous>, transform_indices = @transform_1, window_bounds = array<i64: 128, 512>}, {pipeline_mode = #tpu.pipeline_mode<synchronous>, transform_indices = @transform_2, window_bounds = array<i64: 1, 512>}, {transform_indices = @transform_3, window_bounds = array<i64: 1, 8, 128>}, {transform_indices = @transform_4, window_bounds = array<i64: 1, 8, 128>}, {transform_indices = @transform_5, window_bounds = array<i64: 1, 8, 256>}]} {
    %c0 = arith.constant 0 : index
    %c0_0 = arith.constant 0 : index
    %c0_1 = arith.constant 0 : index
    %0 = vector.load %arg2[%c0, %c0_0, %c0_1] : memref<1x8x128xf32, #tpu.memory_space<vmem>>, vector<1x8x128xf32>
    %1 = vector.shape_cast %0 : vector<1x8x128xf32> to vector<8x128xf32>
    %c0_2 = arith.constant 0 : index
    %c0_3 = arith.constant 0 : index
    %2 = vector.load %arg3[%c0_2, %c0_3] : memref<128x512xf32, #tpu.memory_space<vmem>>, vector<128x512xf32>
    %cst = arith.constant dense<0.000000e+00> : vector<8x512xf32>
    %3 = tpu.matmul %1, %2, %cst {dimension_numbers = #tpu.dot_dimension_numbers<[1], [0], [0], [1], [0, 0, 1, 1], [], []>} : vector<8x128xf32>, vector<128x512xf32>, vector<8x512xf32> -> vector<8x512xf32>
    %c0_4 = arith.constant 0 : index
    %c0_5 = arith.constant 0 : index
    %4 = vector.load %arg4[%c0_4, %c0_5] : memref<1x512xf32, #tpu.memory_space<vmem>>, vector<1x512xf32>
    %5 = vector.broadcast %4 : vector<1x512xf32> to vector<8x512xf32>
    %6 = arith.addf %3, %5 : vector<8x512xf32>
    %7 = vector.extract_strided_slice %6 {offsets = [0, 0], sizes = [8, 128], strides = [1, 1]} : vector<8x512xf32> to vector<8x128xf32>
    %c0_6 = arith.constant 0 : index
    %c0_7 = arith.constant 0 : index
    %c0_8 = arith.constant 0 : index
    %8 = vector.load %arg5[%c0_6, %c0_7, %c0_8] : memref<1x8x128xf32, #tpu.memory_space<vmem>>, vector<1x8x128xf32>
    %9 = vector.shape_cast %8 : vector<1x8x128xf32> to vector<8x128xf32>
    %10 = vector.shape_cast %7 : vector<8x128xf32> to vector<1x8x128xf32>
    tpu.vector_store %arg5[%c0_6, %c0_7, %c0_8], %10 {strides = array<i32>} : memref<1x8x128xf32, #tpu.memory_space<vmem>>, vector<1x8x128xf32>,
    %11 = vector.extract_strided_slice %6 {offsets = [0, 128], sizes = [8, 128], strides = [1, 1]} : vector<8x512xf32> to vector<8x128xf32>
    %c0_9 = arith.constant 0 : index
    %c0_10 = arith.constant 0 : index
    %c0_11 = arith.constant 0 : index
    %12 = vector.load %arg6[%c0_9, %c0_10, %c0_11] : memref<1x8x128xf32, #tpu.memory_space<vmem>>, vector<1x8x128xf32>
    %13 = vector.shape_cast %12 : vector<1x8x128xf32> to vector<8x128xf32>
    %14 = vector.shape_cast %11 : vector<8x128xf32> to vector<1x8x128xf32>
    tpu.vector_store %arg6[%c0_9, %c0_10, %c0_11], %14 {strides = array<i32>} : memref<1x8x128xf32, #tpu.memory_space<vmem>>, vector<1x8x128xf32>,
    %15 = vector.extract_strided_slice %6 {offsets = [0, 256], sizes = [8, 256], strides = [1, 1]} : vector<8x512xf32> to vector<8x256xf32>
    %c0_12 = arith.constant 0 : index
    %c0_13 = arith.constant 0 : index
    %c0_14 = arith.constant 0 : index
    %16 = vector.load %arg7[%c0_12, %c0_13, %c0_14] : memref<1x8x256xf32, #tpu.memory_space<vmem>>, vector<1x8x256xf32>
    %17 = vector.shape_cast %16 : vector<1x8x256xf32> to vector<8x256xf32>
    %18 = vector.shape_cast %15 : vector<8x256xf32> to vector<1x8x256xf32>
    tpu.vector_store %arg7[%c0_12, %c0_13, %c0_14], %18 {strides = array<i32>} : memref<1x8x256xf32, #tpu.memory_space<vmem>>, vector<1x8x256xf32>,
    return
  }
  func.func @transform_0(%arg0: i32, %arg1: i32) -> (i32, i32, i32) {
    %c0_i32 = arith.constant 0 : i32
    %c0_i32_0 = arith.constant 0 : i32
    return %arg0, %arg1, %c0_i32 : i32, i32, i32
  }
  func.func @transform_1(%arg0: i32, %arg1: i32) -> (i32, i32) {
    %c0_i32 = arith.constant 0 : i32
    %c0_i32_0 = arith.constant 0 : i32
    %c0_i32_1 = arith.constant 0 : i32
    return %c0_i32, %c0_i32_0 : i32, i32
  }
  func.func @transform_2(%arg0: i32, %arg1: i32) -> (i32, i32) {
    %c0_i32 = arith.constant 0 : i32
    %c0_i32_0 = arith.constant 0 : i32
    %c0_i32_1 = arith.constant 0 : i32
    return %c0_i32, %c0_i32_0 : i32, i32
  }
  func.func @transform_3(%arg0: i32, %arg1: i32) -> (i32, i32, i32) {
    %c0_i32 = arith.constant 0 : i32
    %c0_i32_0 = arith.constant 0 : i32
    return %arg0, %arg1, %c0_i32 : i32, i32, i32
  }
  func.func @transform_4(%arg0: i32, %arg1: i32) -> (i32, i32, i32) {
    %c0_i32 = arith.constant 0 : i32
    %c0_i32_0 = arith.constant 0 : i32
    return %arg0, %arg1, %c0_i32 : i32, i32, i32
  }
  func.func @transform_5(%arg0: i32, %arg1: i32) -> (i32, i32, i32) {
    %c0_i32 = arith.constant 0 : i32
    %c0_i32_0 = arith.constant 0 : i32
    return %arg0, %arg1, %c0_i32 : i32, i32, i32
  }
}

</mosaic_0001>

<llo_original>
// kernel: tpu_custom_call.1
$region0: #{tpu_custom_call.1}
  #allocation0 [shape = 'u32[]', space=smem, size = 0x4, offset = 0x4, fixed_abs, tag = 'smem constant byte address 0x4 - core index']
  #allocation1 [shape = 'u32[72,128]{1,0:T(1,128)}', space=vmem, size = 0x9000, scoped, tag = 'internal scratch']
  %s0 = inlined_call_operand.hbm [shape: f32[2,8,128], index: 0, kind: input, shape index: {}]
  %s1 = inlined_call_operand.hbm [shape: f32[128,512], index: 1, kind: input, shape index: {}]
  %s2 = inlined_call_operand.hbm [shape: f32[1,512], index: 2, kind: input, shape index: {}]
  %s3 = inlined_call_operand.hbm [shape: f32[2,8,128], index: 3, kind: output, shape index: {0}]
  %s4 = inlined_call_operand.hbm [shape: f32[2,8,128], index: 4, kind: output, shape index: {1}]
  %s5 = inlined_call_operand.hbm [shape: f32[2,8,256], index: 5, kind: output, shape index: {2}]
  %6 = xla_tuple %s3, %s4, %s5
  %s7 = sld [smem:[#allocation0]]
  $region73: #{tpu_custom_call.1} parent=0
    _
  %s9 = ssub.s32 1, %s7
  %s10 = scalar_select 0, %s9, %s7
  $region1: #{tpu_custom_call.1} parent=0
    #allocation2 [shape = 'u8[8192]{0}', space=vmem, size = 0x2000, scoped, tag = 'input window, operand 0']
    #allocation3 [shape = 's32[2]{0}', space=sflag, size = 0x8, scoped, tag = 'scoped memory for tpu_custom_call.1']
    #allocation4 [shape = 's32[2]{0}', space=sflag, size = 0x8, scoped, tag = 'scoped memory for tpu_custom_call.1']
    #allocation5 [shape = 'u8[262144]{0}', space=vmem, size = 0x40000, scoped, tag = 'input window, operand 1, single buffered']
    #allocation6 [shape = 's32[1]{0}', space=sflag, size = 0x4, scoped, tag = 'scoped memory for tpu_custom_call.1']
    #allocation7 [shape = 'u8[2048]{0}', space=vmem, size = 0x800, scoped, tag = 'input window, operand 2, single buffered']
    #allocation8 [shape = 'u8[8192]{0}', space=vmem, size = 0x2000, scoped, tag = 'output window, operand 0']
    #allocation9 [shape = 'u8[8192]{0}', space=vmem, size = 0x2000, scoped, tag = 'output window, operand 1']
    #allocation10 [shape = 's32[2]{0}', space=sflag, size = 0x8, scoped, tag = 'scoped memory for tpu_custom_call.1']
    #allocation11 [shape = 'u8[16384]{0}', space=vmem, size = 0x4000, scoped, tag = 'output window, operand 2']
    %11 = vsyncpa [#allocation3], 0
    %s12 = scalar_lea.sflag [#allocation3], 1
    %13 = vsyncpa %s12, 0
    %14 = vsyncpa [#allocation6], 0
    %15 = vsyncpa [#allocation4], 0
    %s16 = scalar_lea.sflag [#allocation4], 1
    %17 = vsyncpa %s16, 0
    %18 = vsyncpa [#allocation10], 0
    %s19 = scalar_lea.sflag [#allocation10], 1
    %20 = vsyncpa %s19, 0
    loop: start=0, step=1, limit=4
    $region2: #{tpu_custom_call.1} parent=1 // loop_pre_header
      _
    $region3: #{tpu_custom_call.1} parent=1 // loop_header
      %s22 = sphi 0, %s26
      %p23 = scmp.ge.s32.totalorder %s22, 4
      %s29 = sphi 0, %s41
      %s30 = sphi 0, %s37
      %s31 = sphi 0, %s29
      %s32 = sphi 0, %s30
      %s33 = sphi 0, %s31
      %s34 = sphi 0, %s32
      %s46 = sphi 0, %s48
      %s49 = sphi 0, %s46
      %s50 = sphi 0, %s49
      %s66 = sphi 0, %s50
      %s70 = sphi 0, %s70
      %s72 = sphi 0, %s70
      %s73 = sphi 0, %s72
      %s87 = sphi 0, %s73
      %s91 = sphi 0, %s91
      %s93 = sphi 0, %s91
      %s94 = sphi 0, %s93
      %s108 = sphi 0, %s94
      %s116 = sphi 0, %s118
      %s119 = sphi 0, %s116
      %s120 = sphi 0, %s119
      %s136 = sphi 0, %s120
      %s144 = sphi 0, %s146
      %s147 = sphi 0, %s144
      %s148 = sphi 0, %s147
      %s164 = sphi 0, %s148
      %s172 = sphi 0, %s174
      %s175 = sphi 0, %s172
      %s176 = sphi 0, %s175
      %s192 = sphi 0, %s176
    $region4: #{tpu_custom_call.1} parent=1 // loop_header_branch
      %25 = sbr.rel (%p23) target = $region8
    $region5: #{tpu_custom_call.1} parent=1 // loop_body
      %s27 = ssub.s32 %s22, 1
      %s28 = ssub.s32 %s22, 2
      %s35 = sadd.s32 1, %s30
      %p36 = scmp.ge.s32.totalorder %s35, 1
      %s37 = scalar_select %p36, 0, %s35
      %s38 = sadd.s32 1, %s29
      %s39 = scalar_select %p36, %s38, %s29
      %p40 = scmp.ge.s32.totalorder %s39, 2
      %s41 = scalar_select %p40, 0, %s39
      %s42 = ssub.s32 %s29, %s41
      %s43 = ssub.s32 %s30, %s37
      %s44 = sor.u32 %s42, %s43
      %p45 = scmp.eq.s32.totalorder %s44, 0
      %s47 = sadd.s32 %s46, 1
      %s48 = scalar_select %p45, %s46, %s47
      %p51 = pneg %p45
      %p52 = scmp.eq.s32.totalorder %s22, 1
      %p53 = por %p51, %p52
      %p54 = scmp.ne.s32.totalorder %s46, %s49
      %p55 = scmp.eq.s32.totalorder %s22, 0
      %p56 = por %p54, %p55
      %p57 = scmp.ne.s32.totalorder %s46, %s49
      %p58 = scmp.eq.s32.totalorder %s27, 1
      %p59 = por %p57, %p58
      %p60 = scmp.ne.s32.totalorder %s49, %s50
      %p61 = scmp.eq.s32.totalorder %s27, 0
      %p62 = por %p60, %p61
      %p63 = scmp.ne.s32.totalorder %s49, %s50
      %p64 = scmp.eq.s32.totalorder %s28, 1
      %p65 = por %p63, %p64
      %p67 = scmp.ne.s32.totalorder %s50, %s66
      %p68 = scmp.eq.s32.totalorder %s28, 0
      %p69 = por %p67, %p68
      %s71 = sadd.s32 %s70, 1
      %p74 = scmp.eq.s32.totalorder %s22, 1
      %p75 = scmp.ne.s32.totalorder %s70, %s72
      %p76 = scmp.eq.s32.totalorder %s22, 0
      %p77 = por %p75, %p76
      %p78 = scmp.ne.s32.totalorder %s70, %s72
      %p79 = scmp.eq.s32.totalorder %s27, 1
      %p80 = por %p78, %p79
      %p81 = scmp.ne.s32.totalorder %s72, %s73
      %p82 = scmp.eq.s32.totalorder %s27, 0
      %p83 = por %p81, %p82
      %p84 = scmp.ne.s32.totalorder %s72, %s73
      %p85 = scmp.eq.s32.totalorder %s28, 1
      %p86 = por %p84, %p85
      %p88 = scmp.ne.s32.totalorder %s73, %s87
      %p89 = scmp.eq.s32.totalorder %s28, 0
      %p90 = por %p88, %p89
      %s92 = sadd.s32 %s91, 1
      %p95 = scmp.eq.s32.totalorder %s22, 1
      %p96 = scmp.ne.s32.totalorder %s91, %s93
      %p97 = scmp.eq.s32.totalorder %s22, 0
      %p98 = por %p96, %p97
      %p99 = scmp.ne.s32.totalorder %s91, %s93
      %p100 = scmp.eq.s32.totalorder %s27, 1
      %p101 = por %p99, %p100
      %p102 = scmp.ne.s32.totalorder %s93, %s94
      %p103 = scmp.eq.s32.totalorder %s27, 0
      %p104 = por %p102, %p103
      %p105 = scmp.ne.s32.totalorder %s93, %s94
      %p106 = scmp.eq.s32.totalorder %s28, 1
      %p107 = por %p105, %p106
      %p109 = scmp.ne.s32.totalorder %s94, %s108
      %p110 = scmp.eq.s32.totalorder %s28, 0
      %p111 = por %p109, %p110
      %s112 = ssub.s32 %s29, %s41
      %s113 = ssub.s32 %s30, %s37
      %s114 = sor.u32 %s112, %s113
      %p115 = scmp.eq.s32.totalorder %s114, 0
      %s117 = sadd.s32 %s116, 1
      %s118 = scalar_select %p115, %s116, %s117
      %p121 = pneg %p115
      %p122 = scmp.eq.s32.totalorder %s22, 1
      %p123 = por %p121, %p122
      %p124 = scmp.ne.s32.totalorder %s116, %s119
      %p125 = scmp.eq.s32.totalorder %s22, 0
      %p126 = por %p124, %p125
      %p127 = scmp.ne.s32.totalorder %s116, %s119
      %p128 = scmp.eq.s32.totalorder %s27, 1
      %p129 = por %p127, %p128
      %p130 = scmp.ne.s32.totalorder %s119, %s120
      %p131 = scmp.eq.s32.totalorder %s27, 0
      %p132 = por %p130, %p131
      %p133 = scmp.ne.s32.totalorder %s119, %s120
      %p134 = scmp.eq.s32.totalorder %s28, 1
      %p135 = por %p133, %p134
      %p137 = scmp.ne.s32.totalorder %s120, %s136
      %p138 = scmp.eq.s32.totalorder %s28, 0
      %p139 = por %p137, %p138
      %s140 = ssub.s32 %s29, %s41
      %s141 = ssub.s32 %s30, %s37
      %s142 = sor.u32 %s140, %s141
      %p143 = scmp.eq.s32.totalorder %s142, 0
      %s145 = sadd.s32 %s144, 1
      %s146 = scalar_select %p143, %s144, %s145
      %p149 = pneg %p143
      %p150 = scmp.eq.s32.totalorder %s22, 1
      %p151 = por %p149, %p150
      %p152 = scmp.ne.s32.totalorder %s144, %s147
      %p153 = scmp.eq.s32.totalorder %s22, 0
      %p154 = por %p152, %p153
      %p155 = scmp.ne.s32.totalorder %s144, %s147
      %p156 = scmp.eq.s32.totalorder %s27, 1
      %p157 = por %p155, %p156
      %p158 = scmp.ne.s32.totalorder %s147, %s148
      %p159 = scmp.eq.s32.totalorder %s27, 0
      %p160 = por %p158, %p159
      %p161 = scmp.ne.s32.totalorder %s147, %s148
      %p162 = scmp.eq.s32.totalorder %s28, 1
      %p163 = por %p161, %p162
      %p165 = scmp.ne.s32.totalorder %s148, %s164
      %p166 = scmp.eq.s32.totalorder %s28, 0
      %p167 = por %p165, %p166
      %s168 = ssub.s32 %s29, %s41
      %s169 = ssub.s32 %s30, %s37
      %s170 = sor.u32 %s168, %s169
      %p171 = scmp.eq.s32.totalorder %s170, 0
      %s173 = sadd.s32 %s172, 1
      %s174 = scalar_select %p171, %s172, %s173
      %p177 = pneg %p171
      %p178 = scmp.eq.s32.totalorder %s22, 1
      %p179 = por %p177, %p178
      %p180 = scmp.ne.s32.totalorder %s172, %s175
      %p181 = scmp.eq.s32.totalorder %s22, 0
      %p182 = por %p180, %p181
      %p183 = scmp.ne.s32.totalorder %s172, %s175
      %p184 = scmp.eq.s32.totalorder %s27, 1
      %p185 = por %p183, %p184
      %p186 = scmp.ne.s32.totalorder %s175, %s176
      %p187 = scmp.eq.s32.totalorder %s27, 0
      %p188 = por %p186, %p187
      %p189 = scmp.ne.s32.totalorder %s175, %s176
      %p190 = scmp.eq.s32.totalorder %s28, 1
      %p191 = por %p189, %p190
      %p193 = scmp.ne.s32.totalorder %s176, %s192
      %p194 = scmp.eq.s32.totalorder %s28, 0
      %p195 = por %p193, %p194
      %p196 = scmp.le.s32.totalorder 1, %s22
      %p197 = scmp.lt.s32.totalorder %s22, 3
      %p198 = pnand %p196, %p197
      %p199 = pneg %p198
      // Predicated region
      $region9: #{tpu_custom_call.1} parent=5 // pred_check
        _
      $region10: #{tpu_custom_call.1} parent=5 // pred_check_branch
        %201 = sbr.rel (%p198) target = $region12
      $region11: #{tpu_custom_call.1} parent=5 // pred_region
        %s202 = ssub.s32 %s22, 1
        // Predicated region
        $region13: #{tpu_custom_call.1} parent=11 // pred_check
          %p203 = pneg %p83
        $region14: #{tpu_custom_call.1} parent=11 // pred_check_branch
          %205 = sbr.rel (%p203) target = $region16
        $region15: #{tpu_custom_call.1} parent=11 // pred_region
          %207 = vsyncadd [#allocation6], 0
          %s208 = sshll.u32 %s1, 4
          %s209 = int_to_ptr.hbm [resolvable:$true] %s208
          %s210 = sshll.u32 [#allocation5], 4
          %s211 = int_to_ptr.vmem [resolvable:$true] %s210
          %216 = dma.hbm_to_vmem [thread:$0]  %s209, 8192, %s211, [#allocation6], 512, 512, 32
        $region16: #{tpu_custom_call.1} parent=11 // pred_fallthru
          _
        // Predicated region
        $region17: #{tpu_custom_call.1} parent=11 // pred_check
          %p217 = pneg %p104
        $region18: #{tpu_custom_call.1} parent=11 // pred_check_branch
          %219 = sbr.rel (%p217) target = $region20
        $region19: #{tpu_custom_call.1} parent=11 // pred_region
          %221 = vsyncadd [#allocation6], 0
          %s223 = sshll.u32 %s2, 4
          %s224 = int_to_ptr.hbm [resolvable:$true] %s223
          %s225 = sshll.u32 [#allocation7], 4
          %s226 = int_to_ptr.vmem [resolvable:$true] %s225
          %228 = dma.hbm_to_vmem [thread:$0]  %s224, 64, %s226, [#allocation6]
        $region20: #{tpu_custom_call.1} parent=11 // pred_fallthru
          _
      $region12: #{tpu_custom_call.1} parent=5 // pred_fallthru
        _
      %p229 = scmp.lt.s32.totalorder %s22, 2
      // Predicated region
      $region21: #{tpu_custom_call.1} parent=5 // pred_check
        %p230 = pneg %p229
      $region22: #{tpu_custom_call.1} parent=5 // pred_check_branch
        %232 = sbr.rel (%p230) target = $region24
      $region23: #{tpu_custom_call.1} parent=5 // pred_region
        // Predicated region
        $region25: #{tpu_custom_call.1} parent=23 // pred_check
          %p233 = pneg %p56
        $region26: #{tpu_custom_call.1} parent=23 // pred_check_branch
          %235 = sbr.rel (%p233) target = $region28
        $region27: #{tpu_custom_call.1} parent=23 // pred_region
          %s236 = sand.u32 %s46, 1
          %s237 = scalar_lea.sflag [#allocation3], %s236
          %s238 = sand.u32 %s46, 1
          %s239 = smul.addr %s238, 8
          %s240 = scalar_lea.vmem [#allocation2], %s239
          %242 = vsyncadd %s237, 0
          %s243 = sadd.s32 %s30, %s29
          %s244 = smul.addr %s243, 8
          %s245 = scalar_lea.hbm %s0, %s244
          %s247 = sshll.u32 %s245, 4
          %s248 = int_to_ptr.hbm [resolvable:$true] %s247
          %s249 = sshll.u32 %s240, 4
          %s250 = int_to_ptr.vmem [resolvable:$true] %s249
          %252 = dma.hbm_to_vmem [thread:$0]  %s248, 128, %s250, %s237
        $region28: #{tpu_custom_call.1} parent=23 // pred_fallthru
          _
      $region24: #{tpu_custom_call.1} parent=5 // pred_fallthru
        _
      %p253 = scmp.le.s32.totalorder 1, %s22
      %p254 = scmp.lt.s32.totalorder %s22, 3
      %p255 = pnand %p253, %p254
      %p256 = pneg %p255
      // Predicated region
      $region29: #{tpu_custom_call.1} parent=5 // pred_check
        _
      $region30: #{tpu_custom_call.1} parent=5 // pred_check_branch
        %258 = sbr.rel (%p255) target = $region32
      $region31: #{tpu_custom_call.1} parent=5 // pred_region
        %s259 = ssub.s32 %s22, 1
        %s260 = sand.u32 %s49, 1
        %s261 = scalar_lea.sflag [#allocation3], %s260
        %s262 = sand.u32 %s49, 1
        %s263 = smul.addr %s262, 8
        %s264 = scalar_lea.vmem [#allocation2], %s263
        // Predicated region
        $region33: #{tpu_custom_call.1} parent=31 // pred_check
          %p265 = pneg %p62
        $region34: #{tpu_custom_call.1} parent=31 // pred_check_branch
          %267 = sbr.rel (%p265) target = $region36
        $region35: #{tpu_custom_call.1} parent=31 // pred_region
          %269 = dma.done %s261, 128
        $region36: #{tpu_custom_call.1} parent=31 // pred_fallthru
          _
        // Predicated region
        $region37: #{tpu_custom_call.1} parent=31 // pred_check
          %p270 = pneg %p83
        $region38: #{tpu_custom_call.1} parent=31 // pred_check_branch
          %272 = sbr.rel (%p270) target = $region40
        $region39: #{tpu_custom_call.1} parent=31 // pred_region
          %274 = dma.done [#allocation6], 8192
        $region40: #{tpu_custom_call.1} parent=31 // pred_fallthru
          _
        // Predicated region
        $region41: #{tpu_custom_call.1} parent=31 // pred_check
          %p275 = pneg %p104
        $region42: #{tpu_custom_call.1} parent=31 // pred_check_branch
          %277 = sbr.rel (%p275) target = $region44
        $region43: #{tpu_custom_call.1} parent=31 // pred_region
          %279 = dma.done [#allocation6], 64
        $region44: #{tpu_custom_call.1} parent=31 // pred_fallthru
          _
        %s280 = sand.u32 %s49, 1
        %s281 = scalar_lea.sflag [#allocation3], %s280
        %s282 = sand.u32 %s49, 1
        %s283 = smul.addr %s282, 8
        %s284 = scalar_lea.vmem [#allocation2], %s283
        %p285 = pneg %p62
        %p286 = pneg %p59
        %p287 = pneg %p83
        %p288 = pneg %p80
        %p289 = pneg %p104
        %p290 = pneg %p101
        %p291 = pneg %p132
        %p292 = pneg %p129
        %s293 = sand.u32 %s119, 1
        %s294 = scalar_lea.sflag [#allocation4], %s293
        %s295 = sand.u32 %s119, 1
        %s296 = smul.addr %s295, 8
        %s297 = scalar_lea.vmem [#allocation8], %s296
        %p298 = pneg %p160
        %p299 = pneg %p157
        %s300 = sand.u32 %s27, 1
        %s301 = scalar_lea.sflag [#allocation10], %s300
        %s302 = sand.u32 %s147, 1
        %s303 = smul.addr %s302, 8
        %s304 = scalar_lea.vmem [#allocation9], %s303
        %p305 = pneg %p188
        %p306 = pneg %p185
        %s307 = sand.u32 %s27, 1
        %s308 = scalar_lea.sflag [#allocation10], %s307
        %s309 = sand.u32 %s175, 1
        %s310 = smul.addr %s309, 16
        %s311 = scalar_lea.vmem [#allocation11], %s310
        %v312 = vld [vmem:[%s264] sm:$0xff]
        %v313 = vld [vmem:[#allocation5] sm:$0xff]
        %v314 = vld [vmem:[#allocation5 + $0x8] sm:$0xff]
        %v315 = vld [vmem:[#allocation5 + $0x10] sm:$0xff]
        %v316 = vld [vmem:[#allocation5 + $0x18] sm:$0xff]
        %v317 = vld [vmem:[#allocation5 + $0x20] sm:$0xff]
        %v318 = vld [vmem:[#allocation5 + $0x28] sm:$0xff]
        %v319 = vld [vmem:[#allocation5 + $0x30] sm:$0xff]
        %v320 = vld [vmem:[#allocation5 + $0x38] sm:$0xff]
        %v321 = vld [vmem:[#allocation5 + $0x40] sm:$0xff]
        %v322 = vld [vmem:[#allocation5 + $0x48] sm:$0xff]
        %v323 = vld [vmem:[#allocation5 + $0x50] sm:$0xff]
        %v324 = vld [vmem:[#allocation5 + $0x58] sm:$0xff]
        %v325 = vld [vmem:[#allocation5 + $0x60] sm:$0xff]
        %v326 = vld [vmem:[#allocation5 + $0x68] sm:$0xff]
        %v327 = vld [vmem:[#allocation5 + $0x70] sm:$0xff]
        %v328 = vld [vmem:[#allocation5 + $0x78] sm:$0xff]
        %v329 = vld [vmem:[#allocation5 + $0x80] sm:$0xff]
        %v330 = vld [vmem:[#allocation5 + $0x88] sm:$0xff]
        %v331 = vld [vmem:[#allocation5 + $0x90] sm:$0xff]
        %v332 = vld [vmem:[#allocation5 + $0x98] sm:$0xff]
        %v333 = vld [vmem:[#allocation5 + $0xa0] sm:$0xff]
        %v334 = vld [vmem:[#allocation5 + $0xa8] sm:$0xff]
        %v335 = vld [vmem:[#allocation5 + $0xb0] sm:$0xff]
        %v336 = vld [vmem:[#allocation5 + $0xb8] sm:$0xff]
        %v337 = vld [vmem:[#allocation5 + $0xc0] sm:$0xff]
        %v338 = vld [vmem:[#allocation5 + $0xc8] sm:$0xff]
        %v339 = vld [vmem:[#allocation5 + $0xd0] sm:$0xff]
        %v340 = vld [vmem:[#allocation5 + $0xd8] sm:$0xff]
        %v341 = vld [vmem:[#allocation5 + $0xe0] sm:$0xff]
        %v342 = vld [vmem:[#allocation5 + $0xe8] sm:$0xff]
        %v343 = vld [vmem:[#allocation5 + $0xf0] sm:$0xff]
        %v344 = vld [vmem:[#allocation5 + $0xf8] sm:$0xff]
        %v345 = vld [vmem:[#allocation5 + $0x100] sm:$0xff]
        %v346 = vld [vmem:[#allocation5 + $0x108] sm:$0xff]
        %v347 = vld [vmem:[#allocation5 + $0x110] sm:$0xff]
        %v348 = vld [vmem:[#allocation5 + $0x118] sm:$0xff]
        %v349 = vld [vmem:[#allocation5 + $0x120] sm:$0xff]
        %v350 = vld [vmem:[#allocation5 + $0x128] sm:$0xff]
        %v351 = vld [vmem:[#allocation5 + $0x130] sm:$0xff]
        %v352 = vld [vmem:[#allocation5 + $0x138] sm:$0xff]
        %v353 = vld [vmem:[#allocation5 + $0x140] sm:$0xff]
        %v354 = vld [vmem:[#allocation5 + $0x148] sm:$0xff]
        %v355 = vld [vmem:[#allocation5 + $0x150] sm:$0xff]
        %v356 = vld [vmem:[#allocation5 + $0x158] sm:$0xff]
        %v357 = vld [vmem:[#allocation5 + $0x160] sm:$0xff]
        %v358 = vld [vmem:[#allocation5 + $0x168] sm:$0xff]
        %v359 = vld [vmem:[#allocation5 + $0x170] sm:$0xff]
        %v360 = vld [vmem:[#allocation5 + $0x178] sm:$0xff]
        %v361 = vld [vmem:[#allocation5 + $0x180] sm:$0xff]
        %v362 = vld [vmem:[#allocation5 + $0x188] sm:$0xff]
        %v363 = vld [vmem:[#allocation5 + $0x190] sm:$0xff]
        %v364 = vld [vmem:[#allocation5 + $0x198] sm:$0xff]
        %v365 = vld [vmem:[#allocation5 + $0x1a0] sm:$0xff]
        %v366 = vld [vmem:[#allocation5 + $0x1a8] sm:$0xff]
        %v367 = vld [vmem:[#allocation5 + $0x1b0] sm:$0xff]
        %v368 = vld [vmem:[#allocation5 + $0x1b8] sm:$0xff]
        %v369 = vld [vmem:[#allocation5 + $0x1c0] sm:$0xff]
        %v370 = vld [vmem:[#allocation5 + $0x1c8] sm:$0xff]
        %v371 = vld [vmem:[#allocation5 + $0x1d0] sm:$0xff]
        %v372 = vld [vmem:[#allocation5 + $0x1d8] sm:$0xff]
        %v373 = vld [vmem:[#allocation5 + $0x1e0] sm:$0xff]
        %v374 = vld [vmem:[#allocation5 + $0x1e8] sm:$0xff]
        %v375 = vld [vmem:[#allocation5 + $0x1f0] sm:$0xff]
        %v376 = vld [vmem:[#allocation5 + $0x1f8] sm:$0xff]
        %v377 = vld [vmem:[#allocation7] sm:$0xf]
        %v379 = vperm.slane %v377, 0
        %v380 = vperm.slane %v377, 1
        %v381 = vperm.slane %v377, 2
        %v382 = vperm.slane %v377, 3
        %387 = vmatpush.msra.mxu0 %v373
        %388 = vmatpush.msra.mxu0 %v369
        %389 = vmatpush.msra.mxu0 %v365
        %390 = vmatpush.msra.mxu0 %v361
        %391 = vmatpush.msra.mxu0 %v357
        %392 = vmatpush.msra.mxu0 %v353
        %393 = vmatpush.msra.mxu0 %v349
        %394 = vmatpush.msra.mxu0 %v345
        %395 = vmatpush.msra.mxu0 %v341
        %396 = vmatpush.msra.mxu0 %v337
        %397 = vmatpush.msra.mxu0 %v333
        %398 = vmatpush.msra.mxu0 %v329
        %399 = vmatpush.msra.mxu0 %v325
        %400 = vmatpush.msra.mxu0 %v321
        %401 = vmatpush.msra.mxu0 %v317
        %402 = vmatpush.msra.mxu0 %v313
        %403 = vmatmul.f32.gmra.mxu0 %v312
        %v404 = vpop.f32.mrf.mxu0
        %v405 = vadd.f32 %v379, %v404
        %406 = vdwg.mxu0
        %407 = vmatpush.msra.mxu0 %v374
        %408 = vmatpush.msra.mxu0 %v370
        %409 = vmatpush.msra.mxu0 %v366
        %410 = vmatpush.msra.mxu0 %v362
        %411 = vmatpush.msra.mxu0 %v358
        %412 = vmatpush.msra.mxu0 %v354
        %413 = vmatpush.msra.mxu0 %v350
        %414 = vmatpush.msra.mxu0 %v346
        %415 = vmatpush.msra.mxu0 %v342
        %416 = vmatpush.msra.mxu0 %v338
        %417 = vmatpush.msra.mxu0 %v334
        %418 = vmatpush.msra.mxu0 %v330
        %419 = vmatpush.msra.mxu0 %v326
        %420 = vmatpush.msra.mxu0 %v322
        %421 = vmatpush.msra.mxu0 %v318
        %422 = vmatpush.msra.mxu0 %v314
        %423 = vmatmul.f32.gmra.mxu0 %v312
        %v424 = vpop.f32.mrf.mxu0
        %v425 = vadd.f32 %v380, %v424
        %426 = vdwg.mxu0
        %427 = vmatpush.msra.mxu0 %v375
        %428 = vmatpush.msra.mxu0 %v371
        %429 = vmatpush.msra.mxu0 %v367
        %430 = vmatpush.msra.mxu0 %v363
        %431 = vmatpush.msra.mxu0 %v359
        %432 = vmatpush.msra.mxu0 %v355
        %433 = vmatpush.msra.mxu0 %v351
        %434 = vmatpush.msra.mxu0 %v347
        %435 = vmatpush.msra.mxu0 %v343
        %436 = vmatpush.msra.mxu0 %v339
        %437 = vmatpush.msra.mxu0 %v335
        %438 = vmatpush.msra.mxu0 %v331
        %439 = vmatpush.msra.mxu0 %v327
        %440 = vmatpush.msra.mxu0 %v323
        %441 = vmatpush.msra.mxu0 %v319
        %442 = vmatpush.msra.mxu0 %v315
        %443 = vmatmul.f32.gmra.mxu0 %v312
        %v444 = vpop.f32.mrf.mxu0
        %v445 = vadd.f32 %v381, %v444
        %446 = vdwg.mxu0
        %447 = vmatpush.msra.mxu0 %v376
        %448 = vmatpush.msra.mxu0 %v372
        %449 = vmatpush.msra.mxu0 %v368
        %450 = vmatpush.msra.mxu0 %v364
        %451 = vmatpush.msra.mxu0 %v360
        %452 = vmatpush.msra.mxu0 %v356
        %453 = vmatpush.msra.mxu0 %v352
        %454 = vmatpush.msra.mxu0 %v348
        %455 = vmatpush.msra.mxu0 %v344
        %456 = vmatpush.msra.mxu0 %v340
        %457 = vmatpush.msra.mxu0 %v336
        %458 = vmatpush.msra.mxu0 %v332
        %459 = vmatpush.msra.mxu0 %v328
        %460 = vmatpush.msra.mxu0 %v324
        %461 = vmatpush.msra.mxu0 %v320
        %462 = vmatpush.msra.mxu0 %v316
        %463 = vmatmul.f32.gmra.mxu0 %v312
        %v464 = vpop.f32.mrf.mxu0
        %v465 = vadd.f32 %v382, %v464
        %466 = vdwg.mxu0
        %467 = vst [vmem:[%s297] sm:$0xff] %v405
        %468 = vst [vmem:[%s304] sm:$0xff] %v425
        %469 = vst [vmem:[%s311] sm:$0xff] %v445
        %470 = vst [vmem:[%s311 + $0x8] sm:$0xff] %v465
        %s471 = sand.u32 %s119, 1
        %s472 = scalar_lea.sflag [#allocation4], %s471
        %s473 = sand.u32 %s119, 1
        %s474 = smul.addr %s473, 8
        %s475 = scalar_lea.vmem [#allocation8], %s474
        %s476 = sand.u32 %s27, 1
        %s477 = scalar_lea.sflag [#allocation10], %s476
        %s478 = sand.u32 %s147, 1
        %s479 = smul.addr %s478, 8
        %s480 = scalar_lea.vmem [#allocation9], %s479
        %s481 = sand.u32 %s27, 1
        %s482 = scalar_lea.sflag [#allocation10], %s481
        %s483 = sand.u32 %s175, 1
        %s484 = smul.addr %s483, 16
        %s485 = scalar_lea.vmem [#allocation11], %s484
        // Predicated region
        $region45: #{tpu_custom_call.1} parent=31 // pred_check
          %p486 = pneg %p129
        $region46: #{tpu_custom_call.1} parent=31 // pred_check_branch
          %488 = sbr.rel (%p486) target = $region48
        $region47: #{tpu_custom_call.1} parent=31 // pred_region
          %490 = vsyncadd %s472, 0
          %s491 = sadd.s32 %s32, %s31
          %s492 = smul.addr %s491, 8
          %s493 = scalar_lea.hbm %s3, %s492
          %s495 = sshll.u32 %s475, 4
          %s496 = int_to_ptr.vmem [resolvable:$true] %s495
          %s497 = sshll.u32 %s493, 4
          %s498 = int_to_ptr.hbm [resolvable:$true] %s497
          %500 = dma.vmem_to_hbm [thread:$0]  %s496, 128, %s498, %s472
        $region48: #{tpu_custom_call.1} parent=31 // pred_fallthru
          _
        // Predicated region
        $region49: #{tpu_custom_call.1} parent=31 // pred_check
          %p501 = pneg %p157
        $region50: #{tpu_custom_call.1} parent=31 // pred_check_branch
          %503 = sbr.rel (%p501) target = $region52
        $region51: #{tpu_custom_call.1} parent=31 // pred_region
          %505 = vsyncadd %s477, 0
          %s506 = sadd.s32 %s32, %s31
          %s507 = smul.addr %s506, 8
          %s508 = scalar_lea.hbm %s4, %s507
          %s510 = sshll.u32 %s480, 4
          %s511 = int_to_ptr.vmem [resolvable:$true] %s510
          %s512 = sshll.u32 %s508, 4
          %s513 = int_to_ptr.hbm [resolvable:$true] %s512
          %515 = dma.vmem_to_hbm [thread:$0]  %s511, 128, %s513, %s477
        $region52: #{tpu_custom_call.1} parent=31 // pred_fallthru
          _
        // Predicated region
        $region53: #{tpu_custom_call.1} parent=31 // pred_check
          %p516 = pneg %p185
        $region54: #{tpu_custom_call.1} parent=31 // pred_check_branch
          %518 = sbr.rel (%p516) target = $region56
        $region55: #{tpu_custom_call.1} parent=31 // pred_region
          %520 = vsyncadd %s482, 0
          %s521 = smul.addr %s32, 2
          %s522 = smul.addr %s31, 2
          %s523 = sadd.s32 %s521, %s522
          %s524 = smul.addr %s523, 8
          %s525 = scalar_lea.hbm %s5, %s524
          %s527 = sshll.u32 %s485, 4
          %s528 = int_to_ptr.vmem [resolvable:$true] %s527
          %s529 = sshll.u32 %s525, 4
          %s530 = int_to_ptr.hbm [resolvable:$true] %s529
          %532 = dma.vmem_to_hbm [thread:$0]  %s528, 256, %s530, %s482
        $region56: #{tpu_custom_call.1} parent=31 // pred_fallthru
          _
      $region32: #{tpu_custom_call.1} parent=5 // pred_fallthru
        _
      %p533 = scmp.le.s32.totalorder 2, %s22
      // Predicated region
      $region57: #{tpu_custom_call.1} parent=5 // pred_check
        %p534 = pneg %p533
      $region58: #{tpu_custom_call.1} parent=5 // pred_check_branch
        %536 = sbr.rel (%p534) target = $region60
      $region59: #{tpu_custom_call.1} parent=5 // pred_region
        %s537 = ssub.s32 %s22, 2
        // Predicated region
        $region61: #{tpu_custom_call.1} parent=59 // pred_check
          %p538 = pneg %p135
        $region62: #{tpu_custom_call.1} parent=59 // pred_check_branch
          %540 = sbr.rel (%p538) target = $region64
        $region63: #{tpu_custom_call.1} parent=59 // pred_region
          %s541 = sand.u32 %s120, 1
          %s542 = scalar_lea.sflag [#allocation4], %s541
          %s543 = sand.u32 %s120, 1
          %s544 = smul.addr %s543, 8
          %s545 = scalar_lea.vmem [#allocation8], %s544
          %547 = dma.done %s542, 128
        $region64: #{tpu_custom_call.1} parent=59 // pred_fallthru
          _
        // Predicated region
        $region65: #{tpu_custom_call.1} parent=59 // pred_check
          %p548 = pneg %p163
        $region66: #{tpu_custom_call.1} parent=59 // pred_check_branch
          %550 = sbr.rel (%p548) target = $region68
        $region67: #{tpu_custom_call.1} parent=59 // pred_region
          %s551 = sand.u32 %s28, 1
          %s552 = scalar_lea.sflag [#allocation10], %s551
          %s553 = sand.u32 %s148, 1
          %s554 = smul.addr %s553, 8
          %s555 = scalar_lea.vmem [#allocation9], %s554
          %557 = dma.done %s552, 128
        $region68: #{tpu_custom_call.1} parent=59 // pred_fallthru
          _
        // Predicated region
        $region69: #{tpu_custom_call.1} parent=59 // pred_check
          %p558 = pneg %p191
        $region70: #{tpu_custom_call.1} parent=59 // pred_check_branch
          %560 = sbr.rel (%p558) target = $region72
        $region71: #{tpu_custom_call.1} parent=59 // pred_region
          %s561 = sand.u32 %s28, 1
          %s562 = scalar_lea.sflag [#allocation10], %s561
          %s563 = sand.u32 %s176, 1
          %s564 = smul.addr %s563, 16
          %s565 = scalar_lea.vmem [#allocation11], %s564
          %567 = dma.done %s562, 256
        $region72: #{tpu_custom_call.1} parent=59 // pred_fallthru
          _
      $region60: #{tpu_custom_call.1} parent=5 // pred_fallthru
        _
    $region6: #{tpu_custom_call.1} parent=1 // loop_footer
      %s26 = sadd.s32 1, %s22
    $region7: #{tpu_custom_call.1} parent=1 // loop_footer_branch
      %21 = sbr.rel target = $region3
    $region8: #{tpu_custom_call.1} parent=1 // loop_exit
      _
    %568 = vsyncpa [#allocation3], 1
    %s569 = scalar_lea.sflag [#allocation3], 1
    %570 = vsyncpa %s569, 1
    %571 = vsyncpa [#allocation6], 1
    %572 = vsyncpa [#allocation4], 1
    %s573 = scalar_lea.sflag [#allocation4], 1
    %574 = vsyncpa %s573, 1
    %575 = vsyncpa [#allocation10], 1
    %s576 = scalar_lea.sflag [#allocation10], 1
    %577 = vsyncpa %s576, 1

</llo_original>
